<compile_context>
chip_gen: v6e
topology: v6e:2x2x1
jax: 0.10.0
libtpu: 0.0.40
codegen_flags: <defaults>
</compile_context>

<pallas_src>
import functools

import jax
import jax.numpy as jnp
import numpy as np
from jax.experimental import pallas as pl
from jax.experimental.pallas import tpu as pltpu


def _gcn_stack_kernel(x_ref, g_ref, c_ref, wt_ref, b_ref, o_ref, *,
                      use_residual):
    """Fused GCN stack body.

    Grid = (batch_tiles, num_layers).  The output block index is constant over
    the layer axis ("arbitrary"), so o_ref stays resident in VMEM and carries
    the running node features from layer to layer.
    """
    layer = pl.program_id(1)

    # x_ref only seeds the residual stream at layer 0 (its double-buffered
    # VMEM footprint is accounted for in the wrapper's budget).
    @pl.when(layer == 0)
    def _():
        o_ref[...] = x_ref[...]

    x = o_ref[...]                                    # (Bt, Vp, Hp) f32
    bt, v, hp = x.shape

    # Linear: v' = x @ W^T + b (bf16 operands on the MXU, f32 accumulation;
    # weights pre-transposed / stacked / padded in the wrapper).
    x2d = x.reshape(bt * v, hp).astype(jnp.bfloat16)
    vp = jnp.dot(x2d, wt_ref[0], preferred_element_type=jnp.float32)
    vp = (vp + b_ref[0]).reshape(bt, v, hp)           # f32

    # Message passing with degree-weighted self loops + mean reduce, both
    # folded into the precomputed inputs:
    #   ((G + diag(n)) @ v') / diag(G + diag(n))  ==  G_hat @ v' + c * v'
    msg = jnp.einsum('bij,bjh->bih', g_ref[...], vp.astype(jnp.bfloat16),
                     preferred_element_type=jnp.float32)
    out = msg + c_ref[...] * vp                       # (Bt,Vp,1) * (Bt,Vp,Hp)

    # extra_layers = 0, end_norm = '' -> just the final ReLU.
    out = jnp.maximum(out, 0.0)

    if use_residual:
        out = x + out
    o_ref[...] = out.astype(o_ref.dtype)


def _generation_params():
    """(per-step VMEM budget, vmem_limit cap, target MXU rows, min parallel steps)."""
    try:
        vmem_bytes = int(pltpu.get_tpu_info().vmem_capacity_bytes)
    except Exception:
        vmem_bytes = 64 << 20                 # conservative (v7x-sized) default
    if vmem_bytes >= (96 << 20):
        # v5e / v6e: 128 MiB VMEM, 1 TensorCore -> big tiles amortize step overhead.
        return 20 << 20, 96 << 20, 512, 1
    # v7x: 64 MiB VMEM, 2 TensorCores -> tighter budget, >=2 parallel grid steps.
    return 8 << 20, 36 << 20, 256, 2


def _block_vmem_bytes(bt, vp, hp):
    """Per-grid-step VMEM estimate: 2x double buffering per pipelined block,
    with lane padding to 128 and sublane padding to 8 included."""
    v_lane = ((vp + 127) // 128) * 128
    x_blk = bt * vp * hp * 4                  # f32 seed features
    g_blk = bt * vp * v_lane * 2              # bf16 G_hat (lanes padded)
    c_blk = bt * vp * 128 * 4                 # f32 (Bt,Vp,1) pads to 128 lanes
    w_blk = hp * hp * 2                       # bf16 W^T layer slice
    b_blk = 8 * hp * 4                        # f32 bias (sublane padded)
    o_blk = bt * vp * hp * 4                  # f32 residual stream (output)
    pipelined = 2 * (x_blk + g_blk + c_blk + w_blk + b_blk + o_blk)
    temps = bt * vp * hp * (4 + 2 + 2 + 4)    # v' f32, bf16 copies, out temp
    return pipelined + temps


def _pick_batch_tile(B, vp, hp, budget, target_rows, min_parallel):
    """Largest divisor of B within the VMEM budget (keeping >= min_parallel
    steps on the parallel grid axis), stopping once the MXU M-dim Bt*Vp
    reaches target_rows."""
    max_bt = max(1, B // max(1, min_parallel))
    best = 1
    for cand in range(1, max_bt + 1):
        if B % cand:
            continue
        if _block_vmem_bytes(cand, vp, hp) > budget:
            break
        best = cand
        if cand * vp >= target_rows:
            break
    return best


@functools.partial(jax.jit, static_argnames=("use_residual",))
def gcn_stack_forward(x, G, weights, biases, *, use_residual=True):
    """GCNStack.forward (order=True, reduce='mean', extra_layers=0, end_norm='')
    as one fused Pallas kernel over all layers.

    x: (B, V, H), G: (B, V, V), weights: list of (H, H), biases: list of (H,).
    """
    B, V, H = x.shape
    L = len(weights)
    assert len(biases) == L and L >= 1

    # ---- wrapper-side precompute (constant across layers) -------------------
    G32 = jnp.asarray(G, jnp.float32)
    n = jnp.sum(G32, axis=2)                             # (B, V) row degree
    d = jnp.diagonal(G32, axis1=-2, axis2=-1) + n        # diag(G + diag(n))
    inv_d = 1.0 / jnp.where(d == 0.0, 1.0, d)
    g_hat = inv_d[:, :, None] * G32                      # mean divisor folded in
    c = (n * inv_d)[:, :, None]                          # self-loop coeff (B,V,1)

    # Lane-dense feature dim (Hp multiple of 128) and sublane-aligned vertex
    # dim (Vp multiple of 8).  Zero pads provably stay zero through every
    # layer (padded G_hat rows/cols, c rows and x rows/cols are zero) and are
    # sliced off at the end.  NOTE: for H << 128 this pads both K and N of the
    # Linear and inflates its MXU FLOPs by (Hp/H)^2 -- acceptable while the
    # kernel is dominated by the G stream / small shapes; revisit for H in
    # {32, 64} if the Linear ever becomes the bound.
    Hp = ((H + 127) // 128) * 128
    Vp = ((V + 7) // 8) * 8
    ph, pv = Hp - H, Vp - V

    xp = jnp.pad(jnp.asarray(x, jnp.float32), ((0, 0), (0, pv), (0, ph)))
    g_hat = jnp.pad(g_hat, ((0, 0), (0, pv), (0, pv))).astype(jnp.bfloat16)
    cp = jnp.pad(c, ((0, 0), (0, pv), (0, 0)))

    # Pre-transposed, stacked, zero-padded weights/biases (bf16 weights).
    wt = jnp.stack([jnp.asarray(w, jnp.float32).T for w in weights])     # (L,H,H)
    wt = jnp.pad(wt, ((0, 0), (0, ph), (0, ph))).astype(jnp.bfloat16)
    bs = jnp.stack([jnp.asarray(b, jnp.float32) for b in biases])[:, None, :]
    bs = jnp.pad(bs, ((0, 0), (0, 0), (0, ph)))                          # (L,1,Hp)

    budget, vmem_cap, target_rows, min_parallel = _generation_params()
    Bt = _pick_batch_tile(B, Vp, Hp, budget, target_rows, min_parallel)
    grid = (B // Bt, L)

    block_bytes = _block_vmem_bytes(Bt, Vp, Hp)
    vmem_limit = int(min(vmem_cap, max(16 << 20, (block_bytes * 3) // 2)))

    flops = 2 * L * B * Vp * Hp * (Hp + Vp) + 5 * L * B * Vp * Hp
    bytes_accessed = (2 * B * Vp * Hp * 4 + B * Vp * Vp * 2
                      + B * Vp * 128 * 4 + L * (Hp * Hp * 2 + Hp * 4))
    cost = pl.CostEstimate(flops=flops, transcendentals=0,
                           bytes_accessed=bytes_accessed)

    kernel = functools.partial(_gcn_stack_kernel, use_residual=use_residual)
    out = pl.pallas_call(
        kernel,
        out_shape=jax.ShapeDtypeStruct((B, Vp, Hp), jnp.float32),
        grid_spec=pltpu.PrefetchScalarGridSpec(
            num_scalar_prefetch=0,
            grid=grid,
            in_specs=[
                pl.BlockSpec((Bt, Vp, Hp), lambda b, l: (b, 0, 0)),   # x (seed)
                pl.BlockSpec((Bt, Vp, Vp), lambda b, l: (b, 0, 0)),   # G_hat bf16
                pl.BlockSpec((Bt, Vp, 1), lambda b, l: (b, 0, 0)),    # c = n/diag
                pl.BlockSpec((1, Hp, Hp), lambda b, l: (l, 0, 0)),    # W^T bf16
                pl.BlockSpec((1, 1, Hp), lambda b, l: (l, 0, 0)),     # bias
            ],
            out_specs=pl.BlockSpec((Bt, Vp, Hp), lambda b, l: (b, 0, 0)),
        ),
        compiler_params=pltpu.CompilerParams(
            dimension_semantics=("parallel", "arbitrary"),
            vmem_limit_bytes=vmem_limit),
        cost_estimate=cost,
    )(xp, g_hat, cp, wt, bs)

    if ph or pv:
        out = out[:, :V, :H]
    return out.astype(x.dtype)


# ------------------------- pure-JAX reference --------------------------------
def _reference_forward(x, G, weights, biases, use_residual=True):
    B, V, H = x.shape
    eye = jnp.eye(V, dtype=x.dtype)
    for W, b in zip(weights, biases):
        v_prime = x @ W.T + b
        n = jnp.sum(G, axis=2)                               # (B, V)
        Gp = G + jnp.einsum('ij,jk->ijk', n, eye)
        out = jnp.einsum('ijk,ikl->ijl', Gp, v_prime)
        diag = jnp.diagonal(Gp, axis1=-2, axis2=-1)          # (B, V)
        diag = jnp.where(diag == 0.0, 1.0, diag)
        out = out / diag[:, :, None]
        out = jax.nn.relu(out)
        x = x + out if use_residual else out
    return x


if __name__ == "__main__":
    # Small shapes: batch=2, num_vertices=8, hidden_size=32, num_layers=2.
    B, V, H = 2, 8, 32
    num_layers = 2

    key = jax.random.PRNGKey(0)
    kx, kg, *kws = jax.random.split(key, 2 + 2 * num_layers)

    x = jax.random.normal(kx, (B, V, H), dtype=jnp.float32)
    # Binary adjacency (no self loops required).
    G_raw = jax.random.uniform(kg, (B, V, V))
    G = (G_raw > 0.6).astype(jnp.float32)

    # Deterministic Linear params per layer (PyTorch-default-style uniform).
    bound = 1.0 / np.sqrt(H)
    weights, biases = [], []
    for l in range(num_layers):
        w = jax.random.uniform(kws[2 * l], (H, H), minval=-bound, maxval=bound,
                               dtype=jnp.float32)
        bb = jax.random.uniform(kws[2 * l + 1], (H,), minval=-bound,
                                maxval=bound, dtype=jnp.float32)
        weights.append(w)
        biases.append(bb)

    out = gcn_stack_forward(x, G, weights, biases, use_residual=True)
    out = jax.block_until_ready(out)

    ref = _reference_forward(x, G, weights, biases, use_residual=True)
    # bf16 matmul operands (f32 accumulation) -> relaxed tolerance vs f32 ref.
    np.testing.assert_allclose(np.asarray(out), np.asarray(ref),
                               rtol=5e-2, atol=5e-2)

    print("KERNEL_OK")
</pallas_src>

<mosaic_0001>
module attributes {stable_mosaic.version = 11 : i64} {
  func.func @_gcn_stack_kernel(%arg0: i32, %arg1: i32, %arg2: memref<1x8x128xf32, #tpu.memory_space<vmem>>, %arg3: memref<1x8x8xbf16, #tpu.memory_space<vmem>>, %arg4: memref<1x8x1xf32, #tpu.memory_space<vmem>>, %arg5: memref<1x128x128xbf16, #tpu.memory_space<vmem>>, %arg6: memref<1x1x128xf32, #tpu.memory_space<vmem>>, %arg7: memref<1x8x128xf32, #tpu.memory_space<vmem>>) attributes {dimension_semantics = [#tpu.dimension_semantics<parallel>, #tpu.dimension_semantics<arbitrary>], iteration_bounds = array<i64: 2, 2>, scalar_prefetch = 0 : i64, scratch_operands = 0 : i64, tpu.core_type = #tpu.core_type<tc>, window_params = [{transform_indices = @transform_0, window_bounds = array<i64: 1, 8, 128>}, {transform_indices = @transform_1, window_bounds = array<i64: 1, 8, 8>}, {transform_indices = @transform_2, window_bounds = array<i64: 1, 8, 1>}, {transform_indices = @transform_3, window_bounds = array<i64: 1, 128, 128>}, {transform_indices = @transform_4, window_bounds = array<i64: 1, 1, 128>}, {transform_indices = @transform_5, window_bounds = array<i64: 1, 8, 128>}]} {
    %c0_i32 = arith.constant 0 : i32
    %0 = arith.cmpi eq, %arg1, %c0_i32 : i32
    %1 = arith.extui %0 : i1 to i32
    %c0_i32_0 = arith.constant 0 : i32
    %2 = arith.cmpi ne, %1, %c0_i32_0 : i32
    scf.if %2 {
      %c0_20 = arith.constant 0 : index
      %c0_21 = arith.constant 0 : index
      %c0_22 = arith.constant 0 : index
      %25 = vector.load %arg2[%c0_20, %c0_21, %c0_22] : memref<1x8x128xf32, #tpu.memory_space<vmem>>, vector<1x8x128xf32>
      %c0_23 = arith.constant 0 : index
      %c0_24 = arith.constant 0 : index
      %c0_25 = arith.constant 0 : index
      %26 = vector.load %arg7[%c0_23, %c0_24, %c0_25] : memref<1x8x128xf32, #tpu.memory_space<vmem>>, vector<1x8x128xf32>
      tpu.vector_store %arg7[%c0_23, %c0_24, %c0_25], %25 {strides = array<i32>} : memref<1x8x128xf32, #tpu.memory_space<vmem>>, vector<1x8x128xf32>,
    } else {
    }
    %c0 = arith.constant 0 : index
    %c0_1 = arith.constant 0 : index
    %c0_2 = arith.constant 0 : index
    %3 = vector.load %arg7[%c0, %c0_1, %c0_2] : memref<1x8x128xf32, #tpu.memory_space<vmem>>, vector<1x8x128xf32>
    %4 = vector.shape_cast %3 : vector<1x8x128xf32> to vector<8x128xf32>
    %5 = arith.truncf %4 : vector<8x128xf32> to vector<8x128xbf16>
    %c0_3 = arith.constant 0 : index
    %c0_4 = arith.constant 0 : index
    %c0_5 = arith.constant 0 : index
    %6 = vector.load %arg5[%c0_3, %c0_4, %c0_5] : memref<1x128x128xbf16, #tpu.memory_space<vmem>>, vector<1x128x128xbf16>
    %7 = vector.shape_cast %6 : vector<1x128x128xbf16> to vector<128x128xbf16>
    %cst = arith.constant dense<0.000000e+00> : vector<8x128xf32>
    %8 = tpu.matmul %5, %7, %cst {dimension_numbers = #tpu.dot_dimension_numbers<[1], [0], [0], [1], [0, 0, 1, 1], [], []>} : vector<8x128xbf16>, vector<128x128xbf16>, vector<8x128xf32> -> vector<8x128xf32>
    %c0_6 = arith.constant 0 : index
    %c0_7 = arith.constant 0 : index
    %c0_8 = arith.constant 0 : index
    %9 = vector.load %arg6[%c0_6, %c0_7, %c0_8] : memref<1x1x128xf32, #tpu.memory_space<vmem>>, vector<1x1x128xf32>
    %10 = vector.shape_cast %9 : vector<1x1x128xf32> to vector<1x128xf32>
    %11 = vector.broadcast %10 : vector<1x128xf32> to vector<8x128xf32>
    %12 = arith.addf %8, %11 : vector<8x128xf32>
    %13 = vector.shape_cast %12 : vector<8x128xf32> to vector<1x8x128xf32>
    %c0_9 = arith.constant 0 : index
    %c0_10 = arith.constant 0 : index
    %c0_11 = arith.constant 0 : index
    %14 = vector.load %arg3[%c0_9, %c0_10, %c0_11] : memref<1x8x8xbf16, #tpu.memory_space<vmem>>, vector<1x8x8xbf16>
    %15 = arith.truncf %13 : vector<1x8x128xf32> to vector<1x8x128xbf16>
    "tpu.trace_start"() <{level = 10 : i32, message = "bij,bjh->bih"}> : () -> ()
    %cst_12 = arith.constant dense<0.000000e+00> : vector<1x8x128xf32>
    %16 = tpu.matmul %14, %15, %cst_12 {dimension_numbers = #tpu.dot_dimension_numbers<[2], [1], [1], [2], [0, 0, 0, 1, 1, 2], [0], [0]>} : vector<1x8x8xbf16>, vector<1x8x128xbf16>, vector<1x8x128xf32> -> vector<1x8x128xf32>
    "tpu.trace_stop"() : () -> ()
    %c0_13 = arith.constant 0 : index
    %c0_14 = arith.constant 0 : index
    %c0_15 = arith.constant 0 : index
    %17 = vector.load %arg4[%c0_13, %c0_14, %c0_15] : memref<1x8x1xf32, #tpu.memory_space<vmem>>, vector<1x8x1xf32>
    %18 = vector.broadcast %17 : vector<1x8x1xf32> to vector<1x8x128xf32>
    %19 = arith.mulf %18, %13 : vector<1x8x128xf32>
    %20 = arith.addf %16, %19 : vector<1x8x128xf32>
    %cst_16 = arith.constant 0.000000e+00 : f32
    %21 = vector.broadcast %cst_16 : f32 to vector<1x8x128xf32>
    %22 = arith.maximumf %20, %21 : vector<1x8x128xf32>
    %23 = arith.addf %3, %22 : vector<1x8x128xf32>
    %c0_17 = arith.constant 0 : index
    %c0_18 = arith.constant 0 : index
    %c0_19 = arith.constant 0 : index
    %24 = vector.load %arg7[%c0_17, %c0_18, %c0_19] : memref<1x8x128xf32, #tpu.memory_space<vmem>>, vector<1x8x128xf32>
    tpu.vector_store %arg7[%c0_17, %c0_18, %c0_19], %23 {strides = array<i32>} : memref<1x8x128xf32, #tpu.memory_space<vmem>>, vector<1x8x128xf32>,
    return
  }
  func.func @transform_0(%arg0: i32, %arg1: i32) -> (i32, i32, i32) {
    %c0_i32 = arith.constant 0 : i32
    %c0_i32_0 = arith.constant 0 : i32
    %c0_i32_1 = arith.constant 0 : i32
    return %arg0, %c0_i32, %c0_i32_0 : i32, i32, i32
  }
  func.func @transform_1(%arg0: i32, %arg1: i32) -> (i32, i32, i32) {
    %c0_i32 = arith.constant 0 : i32
    %c0_i32_0 = arith.constant 0 : i32
    %c0_i32_1 = arith.constant 0 : i32
    return %arg0, %c0_i32, %c0_i32_0 : i32, i32, i32
  }
  func.func @transform_2(%arg0: i32, %arg1: i32) -> (i32, i32, i32) {
    %c0_i32 = arith.constant 0 : i32
    %c0_i32_0 = arith.constant 0 : i32
    %c0_i32_1 = arith.constant 0 : i32
    return %arg0, %c0_i32, %c0_i32_0 : i32, i32, i32
  }
  func.func @transform_3(%arg0: i32, %arg1: i32) -> (i32, i32, i32) {
    %c0_i32 = arith.constant 0 : i32
    %c0_i32_0 = arith.constant 0 : i32
    %c0_i32_1 = arith.constant 0 : i32
    return %arg1, %c0_i32, %c0_i32_0 : i32, i32, i32
  }
  func.func @transform_4(%arg0: i32, %arg1: i32) -> (i32, i32, i32) {
    %c0_i32 = arith.constant 0 : i32
    %c0_i32_0 = arith.constant 0 : i32
    %c0_i32_1 = arith.constant 0 : i32
    return %arg1, %c0_i32, %c0_i32_0 : i32, i32, i32
  }
  func.func @transform_5(%arg0: i32, %arg1: i32) -> (i32, i32, i32) {
    %c0_i32 = arith.constant 0 : i32
    %c0_i32_0 = arith.constant 0 : i32
    %c0_i32_1 = arith.constant 0 : i32
    return %arg0, %c0_i32, %c0_i32_0 : i32, i32, i32
  }
}

</mosaic_0001>

<llo_original>
// kernel: gcn_stack_forward.1
$region0: #{gcn_stack_forward.1}
  #allocation0 [shape = 'u32[]', space=smem, size = 0x4, offset = 0x4, fixed_abs, tag = 'smem constant byte address 0x4 - core index']
  #allocation1 [shape = 'u32[144,128]{1,0:T(1,128)}', space=vmem, size = 0x12000, scoped, tag = 'internal scratch']
  %s0 = inlined_call_operand.vmem [shape: f32[2,8,128], index: 0, kind: input, shape index: {}]
  %s1 = inlined_call_operand.vmem [shape: bf16[2,8,8], index: 1, kind: input, shape index: {}]
  %s2 = inlined_call_operand.vmem [shape: f32[2,8,1], index: 2, kind: input, shape index: {}]
  %s3 = inlined_call_operand.vmem [shape: bf16[2,128,128], index: 3, kind: input, shape index: {}]
  %s4 = inlined_call_operand.vmem [shape: f32[2,1,128], index: 4, kind: input, shape index: {}]
  %s5 = inlined_call_operand.hbm [shape: f32[2,8,128], index: 5, kind: output, shape index: {}]
  %s6 = sld [smem:[#allocation0]]
  $region57: #{gcn_stack_forward.1} parent=0
    _
  %s8 = ssub.s32 1, %s6
  %s9 = scalar_select 0, %s8, %s6
  $region1: #{gcn_stack_forward.1} parent=0
    #allocation2 [shape = 'u8[8192]{0}', space=vmem, size = 0x2000, scoped, tag = 'output window, operand 0']
    #allocation3 [shape = 's32[2]{0}', space=sflag, size = 0x8, scoped, tag = 'scoped memory for gcn_stack_forward.1']
    %10 = vsyncpa [#allocation3], 0
    %s11 = scalar_lea.sflag [#allocation3], 1
    %12 = vsyncpa %s11, 0
    loop: start=0, step=1, limit=6
    $region2: #{gcn_stack_forward.1} parent=1 // loop_pre_header
      _
    $region3: #{gcn_stack_forward.1} parent=1 // loop_header
      %s14 = sphi 0, %s18
      %p15 = scmp.ge.s32.totalorder %s14, 6
      %s21 = sphi 0, %s33
      %s22 = sphi 0, %s29
      %s23 = sphi 0, %s21
      %s24 = sphi 0, %s22
      %s25 = sphi 0, %s23
      %s26 = sphi 0, %s24
      %s36 = sphi 0, %s38
      %s39 = sphi 0, %s36
      %s40 = sphi 0, %s39
      %s56 = sphi 0, %s40
      %s62 = sphi 0, %s64
      %s65 = sphi 0, %s62
      %s66 = sphi 0, %s65
      %s82 = sphi 0, %s66
      %s88 = sphi 0, %s90
      %s91 = sphi 0, %s88
      %s92 = sphi 0, %s91
      %s108 = sphi 0, %s92
      %s114 = sphi 0, %s116
      %s117 = sphi 0, %s114
      %s118 = sphi 0, %s117
      %s134 = sphi 0, %s118
      %s140 = sphi 0, %s142
      %s143 = sphi 0, %s140
      %s144 = sphi 0, %s143
      %s160 = sphi 0, %s144
      %s166 = sphi 0, %s168
      %s169 = sphi 0, %s166
      %s170 = sphi 0, %s169
      %s186 = sphi 0, %s170
    $region4: #{gcn_stack_forward.1} parent=1 // loop_header_branch
      %17 = sbr.rel (%p15) target = $region8
    $region5: #{gcn_stack_forward.1} parent=1 // loop_body
      %s19 = ssub.s32 %s14, 1
      %s20 = ssub.s32 %s14, 2
      %s27 = sadd.s32 1, %s22
      %p28 = scmp.ge.s32.totalorder %s27, 2
      %s29 = scalar_select %p28, 0, %s27
      %s30 = sadd.s32 1, %s21
      %s31 = scalar_select %p28, %s30, %s21
      %p32 = scmp.ge.s32.totalorder %s31, 2
      %s33 = scalar_select %p32, 0, %s31
      %s34 = ssub.s32 %s21, %s33
      %p35 = scmp.eq.s32.totalorder %s34, 0
      %s37 = sadd.s32 %s36, 1
      %s38 = scalar_select %p35, %s36, %s37
      %p41 = pneg %p35
      %p42 = scmp.eq.s32.totalorder %s14, 3
      %p43 = por %p41, %p42
      %p44 = scmp.ne.s32.totalorder %s36, %s39
      %p45 = scmp.eq.s32.totalorder %s14, 0
      %p46 = por %p44, %p45
      %p47 = scmp.ne.s32.totalorder %s36, %s39
      %p48 = scmp.eq.s32.totalorder %s19, 3
      %p49 = por %p47, %p48
      %p50 = scmp.ne.s32.totalorder %s39, %s40
      %p51 = scmp.eq.s32.totalorder %s19, 0
      %p52 = por %p50, %p51
      %p53 = scmp.ne.s32.totalorder %s39, %s40
      %p54 = scmp.eq.s32.totalorder %s20, 3
      %p55 = por %p53, %p54
      %p57 = scmp.ne.s32.totalorder %s40, %s56
      %p58 = scmp.eq.s32.totalorder %s20, 0
      %p59 = por %p57, %p58
      %s60 = ssub.s32 %s21, %s33
      %p61 = scmp.eq.s32.totalorder %s60, 0
      %s63 = sadd.s32 %s62, 1
      %s64 = scalar_select %p61, %s62, %s63
      %p67 = pneg %p61
      %p68 = scmp.eq.s32.totalorder %s14, 3
      %p69 = por %p67, %p68
      %p70 = scmp.ne.s32.totalorder %s62, %s65
      %p71 = scmp.eq.s32.totalorder %s14, 0
      %p72 = por %p70, %p71
      %p73 = scmp.ne.s32.totalorder %s62, %s65
      %p74 = scmp.eq.s32.totalorder %s19, 3
      %p75 = por %p73, %p74
      %p76 = scmp.ne.s32.totalorder %s65, %s66
      %p77 = scmp.eq.s32.totalorder %s19, 0
      %p78 = por %p76, %p77
      %p79 = scmp.ne.s32.totalorder %s65, %s66
      %p80 = scmp.eq.s32.totalorder %s20, 3
      %p81 = por %p79, %p80
      %p83 = scmp.ne.s32.totalorder %s66, %s82
      %p84 = scmp.eq.s32.totalorder %s20, 0
      %p85 = por %p83, %p84
      %s86 = ssub.s32 %s21, %s33
      %p87 = scmp.eq.s32.totalorder %s86, 0
      %s89 = sadd.s32 %s88, 1
      %s90 = scalar_select %p87, %s88, %s89
      %p93 = pneg %p87
      %p94 = scmp.eq.s32.totalorder %s14, 3
      %p95 = por %p93, %p94
      %p96 = scmp.ne.s32.totalorder %s88, %s91
      %p97 = scmp.eq.s32.totalorder %s14, 0
      %p98 = por %p96, %p97
      %p99 = scmp.ne.s32.totalorder %s88, %s91
      %p100 = scmp.eq.s32.totalorder %s19, 3
      %p101 = por %p99, %p100
      %p102 = scmp.ne.s32.totalorder %s91, %s92
      %p103 = scmp.eq.s32.totalorder %s19, 0
      %p104 = por %p102, %p103
      %p105 = scmp.ne.s32.totalorder %s91, %s92
      %p106 = scmp.eq.s32.totalorder %s20, 3
      %p107 = por %p105, %p106
      %p109 = scmp.ne.s32.totalorder %s92, %s108
      %p110 = scmp.eq.s32.totalorder %s20, 0
      %p111 = por %p109, %p110
      %s112 = ssub.s32 %s22, %s29
      %p113 = scmp.eq.s32.totalorder %s112, 0
      %s115 = sadd.s32 %s114, 1
      %s116 = scalar_select %p113, %s114, %s115
      %p119 = pneg %p113
      %p120 = scmp.eq.s32.totalorder %s14, 3
      %p121 = por %p119, %p120
      %p122 = scmp.ne.s32.totalorder %s114, %s117
      %p123 = scmp.eq.s32.totalorder %s14, 0
      %p124 = por %p122, %p123
      %p125 = scmp.ne.s32.totalorder %s114, %s117
      %p126 = scmp.eq.s32.totalorder %s19, 3
      %p127 = por %p125, %p126
      %p128 = scmp.ne.s32.totalorder %s117, %s118
      %p129 = scmp.eq.s32.totalorder %s19, 0
      %p130 = por %p128, %p129
      %p131 = scmp.ne.s32.totalorder %s117, %s118
      %p132 = scmp.eq.s32.totalorder %s20, 3
      %p133 = por %p131, %p132
      %p135 = scmp.ne.s32.totalorder %s118, %s134
      %p136 = scmp.eq.s32.totalorder %s20, 0
      %p137 = por %p135, %p136
      %s138 = ssub.s32 %s22, %s29
      %p139 = scmp.eq.s32.totalorder %s138, 0
      %s141 = sadd.s32 %s140, 1
      %s142 = scalar_select %p139, %s140, %s141
      %p145 = pneg %p139
      %p146 = scmp.eq.s32.totalorder %s14, 3
      %p147 = por %p145, %p146
      %p148 = scmp.ne.s32.totalorder %s140, %s143
      %p149 = scmp.eq.s32.totalorder %s14, 0
      %p150 = por %p148, %p149
      %p151 = scmp.ne.s32.totalorder %s140, %s143
      %p152 = scmp.eq.s32.totalorder %s19, 3
      %p153 = por %p151, %p152
      %p154 = scmp.ne.s32.totalorder %s143, %s144
      %p155 = scmp.eq.s32.totalorder %s19, 0
      %p156 = por %p154, %p155
      %p157 = scmp.ne.s32.totalorder %s143, %s144
      %p158 = scmp.eq.s32.totalorder %s20, 3
      %p159 = por %p157, %p158
      %p161 = scmp.ne.s32.totalorder %s144, %s160
      %p162 = scmp.eq.s32.totalorder %s20, 0
      %p163 = por %p161, %p162
      %s164 = ssub.s32 %s21, %s33
      %p165 = scmp.eq.s32.totalorder %s164, 0
      %s167 = sadd.s32 %s166, 1
      %s168 = scalar_select %p165, %s166, %s167
      %p171 = pneg %p165
      %p172 = scmp.eq.s32.totalorder %s14, 3
      %p173 = por %p171, %p172
      %p174 = scmp.ne.s32.totalorder %s166, %s169
      %p175 = scmp.eq.s32.totalorder %s14, 0
      %p176 = por %p174, %p175
      %p177 = scmp.ne.s32.totalorder %s166, %s169
      %p178 = scmp.eq.s32.totalorder %s19, 3
      %p179 = por %p177, %p178
      %p180 = scmp.ne.s32.totalorder %s169, %s170
      %p181 = scmp.eq.s32.totalorder %s19, 0
      %p182 = por %p180, %p181
      %p183 = scmp.ne.s32.totalorder %s169, %s170
      %p184 = scmp.eq.s32.totalorder %s20, 3
      %p185 = por %p183, %p184
      %p187 = scmp.ne.s32.totalorder %s170, %s186
      %p188 = scmp.eq.s32.totalorder %s20, 0
      %p189 = por %p187, %p188
      %p190 = scmp.le.s32.totalorder 1, %s14
      %p191 = scmp.lt.s32.totalorder %s14, 5
      %p192 = pnand %p190, %p191
      %p193 = pneg %p192
      // Predicated region
      $region9: #{gcn_stack_forward.1} parent=5 // pred_check
        _
      $region10: #{gcn_stack_forward.1} parent=5 // pred_check_branch
        %195 = sbr.rel (%p192) target = $region12
      $region11: #{gcn_stack_forward.1} parent=5 // pred_region
        %s196 = ssub.s32 %s14, 1
      $region12: #{gcn_stack_forward.1} parent=5 // pred_fallthru
        _
      %p197 = scmp.lt.s32.totalorder %s14, 4
      // Predicated region
      $region13: #{gcn_stack_forward.1} parent=5 // pred_check
        %p198 = pneg %p197
      $region14: #{gcn_stack_forward.1} parent=5 // pred_check_branch
        %200 = sbr.rel (%p198) target = $region16
      $region15: #{gcn_stack_forward.1} parent=5 // pred_region
        // Predicated region
        $region17: #{gcn_stack_forward.1} parent=15 // pred_check
          %p201 = pneg %p46
        $region18: #{gcn_stack_forward.1} parent=15 // pred_check_branch
          %203 = sbr.rel (%p201) target = $region20
        $region19: #{gcn_stack_forward.1} parent=15 // pred_region
          %p204 = scmp.lt.s32.totalorder %s21, 1
          %s205 = scalar_select %p204, %s21, 1
          %s206 = smul.addr %s205, 8
          %s207 = scalar_lea.vmem %s0, %s206
        $region20: #{gcn_stack_forward.1} parent=15 // pred_fallthru
          _
        // Predicated region
        $region21: #{gcn_stack_forward.1} parent=15 // pred_check
          %p208 = pneg %p72
        $region22: #{gcn_stack_forward.1} parent=15 // pred_check_branch
          %210 = sbr.rel (%p208) target = $region24
        $region23: #{gcn_stack_forward.1} parent=15 // pred_region
          %p211 = scmp.lt.s32.totalorder %s21, 1
          %s212 = scalar_select %p211, %s21, 1
          %s213 = smul.addr %s212, 4
          %s214 = scalar_lea.vmem %s1, %s213
        $region24: #{gcn_stack_forward.1} parent=15 // pred_fallthru
          _
        // Predicated region
        $region25: #{gcn_stack_forward.1} parent=15 // pred_check
          %p215 = pneg %p98
        $region26: #{gcn_stack_forward.1} parent=15 // pred_check_branch
          %217 = sbr.rel (%p215) target = $region28
        $region27: #{gcn_stack_forward.1} parent=15 // pred_region
          %p218 = scmp.lt.s32.totalorder %s21, 1
          %s219 = scalar_select %p218, %s21, 1
          %s220 = smul.addr %s219, 8
          %s221 = scalar_lea.vmem %s2, %s220
        $region28: #{gcn_stack_forward.1} parent=15 // pred_fallthru
          _
        // Predicated region
        $region29: #{gcn_stack_forward.1} parent=15 // pred_check
          %p222 = pneg %p124
        $region30: #{gcn_stack_forward.1} parent=15 // pred_check_branch
          %224 = sbr.rel (%p222) target = $region32
        $region31: #{gcn_stack_forward.1} parent=15 // pred_region
          %p225 = scmp.lt.s32.totalorder %s22, 1
          %s226 = scalar_select %p225, %s22, 1
          %s227 = smul.addr %s226, 16
          %s228 = smul.addr %s227, 4
          %s229 = scalar_lea.vmem %s3, %s228
        $region32: #{gcn_stack_forward.1} parent=15 // pred_fallthru
          _
        // Predicated region
        $region33: #{gcn_stack_forward.1} parent=15 // pred_check
          %p230 = pneg %p150
        $region34: #{gcn_stack_forward.1} parent=15 // pred_check_branch
          %232 = sbr.rel (%p230) target = $region36
        $region35: #{gcn_stack_forward.1} parent=15 // pred_region
          %p233 = scmp.lt.s32.totalorder %s22, 1
          %s234 = scalar_select %p233, %s22, 1
          %s235 = scalar_lea.vmem %s4, %s234
        $region36: #{gcn_stack_forward.1} parent=15 // pred_fallthru
          _
      $region16: #{gcn_stack_forward.1} parent=5 // pred_fallthru
        _
      %p236 = scmp.le.s32.totalorder 1, %s14
      %p237 = scmp.lt.s32.totalorder %s14, 5
      %p238 = pnand %p236, %p237
      %p239 = pneg %p238
      // Predicated region
      $region37: #{gcn_stack_forward.1} parent=5 // pred_check
        _
      $region38: #{gcn_stack_forward.1} parent=5 // pred_check_branch
        %241 = sbr.rel (%p238) target = $region40
      $region39: #{gcn_stack_forward.1} parent=5 // pred_region
        %s242 = ssub.s32 %s14, 1
        %p243 = scmp.lt.s32.totalorder %s23, 1
        %s244 = scalar_select %p243, %s23, 1
        %s245 = smul.addr %s244, 8
        %s246 = scalar_lea.vmem %s0, %s245
        %p247 = pneg %p52
        %p248 = pneg %p49
        %p249 = scmp.lt.s32.totalorder %s23, 1
        %s250 = scalar_select %p249, %s23, 1
        %s251 = smul.addr %s250, 4
        %s252 = scalar_lea.vmem %s1, %s251
        %p253 = pneg %p78
        %p254 = pneg %p75
        %p255 = scmp.lt.s32.totalorder %s23, 1
        %s256 = scalar_select %p255, %s23, 1
        %s257 = smul.addr %s256, 8
        %s258 = scalar_lea.vmem %s2, %s257
        %p259 = pneg %p104
        %p260 = pneg %p101
        %p261 = scmp.lt.s32.totalorder %s24, 1
        %s262 = scalar_select %p261, %s24, 1
        %s263 = smul.addr %s262, 16
        %s264 = smul.addr %s263, 4
        %s265 = scalar_lea.vmem %s3, %s264
        %p266 = pneg %p130
        %p267 = pneg %p127
        %p268 = scmp.lt.s32.totalorder %s24, 1
        %s269 = scalar_select %p268, %s24, 1
        %s270 = scalar_lea.vmem %s4, %s269
        %p271 = pneg %p156
        %p272 = pneg %p153
        %p273 = pneg %p182
        %p274 = pneg %p179
        %s275 = sand.u32 %s169, 1
        %s276 = scalar_lea.sflag [#allocation3], %s275
        %s277 = sand.u32 %s169, 1
        %s278 = smul.addr %s277, 8
        %s279 = scalar_lea.vmem [#allocation2], %s278
        %p280 = scmp.lt.s32.totalorder %s23, 1
        %s281 = scalar_select %p280, %s23, 1
        %s282 = smul.addr %s281, 8
        %s283 = scalar_lea.vmem %s0, %s282
        %p284 = scmp.lt.s32.totalorder %s23, 1
        %s285 = scalar_select %p284, %s23, 1
        %s286 = smul.addr %s285, 4
        %s287 = scalar_lea.vmem %s1, %s286
        %p288 = scmp.lt.s32.totalorder %s23, 1
        %s289 = scalar_select %p288, %s23, 1
        %s290 = smul.addr %s289, 8
        %s291 = scalar_lea.vmem %s2, %s290
        %p292 = scmp.lt.s32.totalorder %s24, 1
        %s293 = scalar_select %p292, %s24, 1
        %s294 = smul.addr %s293, 16
        %s295 = smul.addr %s294, 4
        %s296 = scalar_lea.vmem %s3, %s295
        %p297 = scmp.lt.s32.totalorder %s24, 1
        %s298 = scalar_select %p297, %s24, 1
        %s299 = scalar_lea.vmem %s4, %s298
        %p301 = scmp.eq.s32.totalorder %s24, 0
        // Predicated region
        $region41: #{gcn_stack_forward.1} parent=39 // pred_check
          %p302 = pneg %p301
        $region42: #{gcn_stack_forward.1} parent=39 // pred_check_branch
          %304 = sbr.rel (%p302) target = $region44
        $region43: #{gcn_stack_forward.1} parent=39 // pred_region
          %v305 = vld [vmem:[%s283] sm:$0xff]
          %306 = vst [vmem:[%s279] sm:$0xff] %v305
        $region44: #{gcn_stack_forward.1} parent=39 // pred_fallthru
          _
        %v307 = vld [vmem:[%s279] sm:$0xff]
        %v308 = vpack.c.bf16 %v307, %v307
        %v309 = vld [vmem:[%s296] sm:$0xf]
        %v310 = vld [vmem:[%s296 + $0x4] sm:$0xf]
        %v311 = vld [vmem:[%s296 + $0x8] sm:$0xf]
        %v312 = vld [vmem:[%s296 + $0xc] sm:$0xf]
        %v313 = vld [vmem:[%s296 + $0x10] sm:$0xf]
        %v314 = vld [vmem:[%s296 + $0x14] sm:$0xf]
        %v315 = vld [vmem:[%s296 + $0x18] sm:$0xf]
        %v316 = vld [vmem:[%s296 + $0x1c] sm:$0xf]
        %v317 = vld [vmem:[%s296 + $0x20] sm:$0xf]
        %v318 = vld [vmem:[%s296 + $0x24] sm:$0xf]
        %v319 = vld [vmem:[%s296 + $0x28] sm:$0xf]
        %v320 = vld [vmem:[%s296 + $0x2c] sm:$0xf]
        %v321 = vld [vmem:[%s296 + $0x30] sm:$0xf]
        %v322 = vld [vmem:[%s296 + $0x34] sm:$0xf]
        %v323 = vld [vmem:[%s296 + $0x38] sm:$0xf]
        %v324 = vld [vmem:[%s296 + $0x3c] sm:$0xf]
        %v325 = vld [vmem:[%s299] sm:$0x1]
        %v327 = vlaneseq
        %v328 = vshrl.u32 %v327, 7
        %v329 = vsub.s32 0, %v328
        %v330 = vrot.slane %v325, %v329
        %v348 = vunpack.c.l.b16 %v309
        %v349 = vunpack.c.l.b16 %v310
        %v350 = vunpack.c.l.b16 %v311
        %v351 = vunpack.c.l.b16 %v312
        %v352 = vunpack.c.l.b16 %v313
        %v353 = vunpack.c.l.b16 %v314
        %v354 = vunpack.c.l.b16 %v315
        %v355 = vunpack.c.l.b16 %v316
        %v356 = vunpack.c.l.b16 %v317
        %v357 = vunpack.c.l.b16 %v318
        %v358 = vunpack.c.l.b16 %v319
        %v359 = vunpack.c.l.b16 %v320
        %v360 = vunpack.c.l.b16 %v321
        %v361 = vunpack.c.l.b16 %v322
        %v362 = vunpack.c.l.b16 %v323
        %v363 = vunpack.c.l.b16 %v324
        %v364 = vpack.c.b16 %v349, %v348
        %v365 = vpack.c.b16 %v351, %v350
        %v366 = vpack.c.b16 %v353, %v352
        %v367 = vpack.c.b16 %v355, %v354
        %v368 = vpack.c.b16 %v357, %v356
        %v369 = vpack.c.b16 %v359, %v358
        %v370 = vpack.c.b16 %v361, %v360
        %v371 = vpack.c.b16 %v363, %v362
        %380 = vmatprep.subr.bf16.mxu0 0
        %381 = vmatpush1.bf16.msra.mxu0 %v371
        %382 = vmatprep.subr.bf16.mxu0 0
        %383 = vmatpush1.bf16.msra.mxu0 %v370
        %384 = vmatprep.subr.bf16.mxu0 0
        %385 = vmatpush1.bf16.msra.mxu0 %v369
        %386 = vmatprep.subr.bf16.mxu0 0
        %387 = vmatpush1.bf16.msra.mxu0 %v368
        %388 = vmatprep.subr.bf16.mxu0 0
        %389 = vmatpush1.bf16.msra.mxu0 %v367
        %390 = vmatprep.subr.bf16.mxu0 0
        %391 = vmatpush1.bf16.msra.mxu0 %v366
        %392 = vmatprep.subr.bf16.mxu0 0
        %393 = vmatpush1.bf16.msra.mxu0 %v365
        %394 = vmatprep.subr.bf16.mxu0 0
        %395 = vmatpush1.bf16.msra.mxu0 %v364
        %396 = vmatprep.subr.bf16.mxu0 0
        %397 = vmatpush2.bf16.msra.mxu0 0
        %398 = vmatprep.subr.bf16.mxu0 0
        %399 = vmatpush2.bf16.msra.mxu0 0
        %400 = vmatprep.subr.bf16.mxu0 0
        %401 = vmatpush2.bf16.msra.mxu0 0
        %402 = vmatprep.subr.bf16.mxu0 0
        %403 = vmatpush2.bf16.msra.mxu0 0
        %404 = vmatprep.subr.bf16.mxu0 0
        %405 = vmatpush2.bf16.msra.mxu0 0
        %406 = vmatprep.subr.bf16.mxu0 0
        %407 = vmatpush2.bf16.msra.mxu0 0
        %408 = vmatprep.subr.bf16.mxu0 0
        %409 = vmatpush2.bf16.msra.mxu0 0
        %410 = vmatprep.subr.bf16.mxu0 0
        %411 = vmatpush2.bf16.msra.mxu0 0
        %412 = vmatprep.mubr.bf16.mxu0 0
        %413 = vmatmul.mubr.bf16.gmra.mxu0 %v308
        %v414 = vpop.f32.mrf.mxu0
        %v415 = vadd.f32 %v330, %v414
        %v416 = vpop.f32.mrf.mxu0
        %v417 = vpop.f32.mrf.mxu0
        %v418 = vpop.f32.mrf.mxu0
        %419 = vdwg.mxu0
        %v420 = vld [vmem:[%s287] sm:$0xf]
        %v421 = vpack.c.bf16 %v415, %v415
        %v422 = vld [vmem:[%s291] sm:$0xff]
        %424 = vset.pattern.permute.xlu0 0
        %425 = vperm.xlu0 %424, %v422
        %v426 = vpop.permute.xlu0 %425
        %v428 = vmul.f32 %v426, %v415
        %vm429 = vcmask 64512
        %v431 = vsel %vm429, %v420, 0
        %vm433 = vcmask 1043456
        %v435 = vsel %vm433, %v421, 0
        %437 = vmatprep.subr.bf16.mxu0 0
        %438 = vmatpush1.bf16.msra.mxu0 0
        %439 = vmatprep.subr.bf16.mxu0 0
        %440 = vmatpush1.bf16.msra.mxu0 0
        %441 = vmatprep.subr.bf16.mxu0 0
        %442 = vmatpush1.bf16.msra.mxu0 0
        %443 = vmatprep.subr.bf16.mxu0 0
        %444 = vmatpush1.bf16.msra.mxu0 0
        %445 = vmatprep.subr.bf16.mxu0 0
        %446 = vmatpush1.bf16.msra.mxu0 0
        %447 = vmatprep.subr.bf16.mxu0 0
        %448 = vmatpush1.bf16.msra.mxu0 0
        %449 = vmatprep.subr.bf16.mxu0 0
        %450 = vmatpush1.bf16.msra.mxu0 0
        %451 = vmatprep.subr.bf16.mxu0 0
        %452 = vmatpush1.bf16.msra.mxu0 %v435
        %453 = vmatprep.subr.bf16.mxu0 0
        %454 = vmatpush2.bf16.msra.mxu0 0
        %455 = vmatprep.subr.bf16.mxu0 0
        %456 = vmatpush2.bf16.msra.mxu0 0
        %457 = vmatprep.subr.bf16.mxu0 0
        %458 = vmatpush2.bf16.msra.mxu0 0
        %459 = vmatprep.subr.bf16.mxu0 0
        %460 = vmatpush2.bf16.msra.mxu0 0
        %461 = vmatprep.subr.bf16.mxu0 0
        %462 = vmatpush2.bf16.msra.mxu0 0
        %463 = vmatprep.subr.bf16.mxu0 0
        %464 = vmatpush2.bf16.msra.mxu0 0
        %465 = vmatprep.subr.bf16.mxu0 0
        %466 = vmatpush2.bf16.msra.mxu0 0
        %467 = vmatprep.subr.bf16.mxu0 0
        %468 = vmatpush2.bf16.msra.mxu0 0
        %469 = vmatprep.mubr.bf16.mxu0 0
        %470 = vmatmul.mubr.bf16.gmra.mxu0 %v431
        %v471 = vpop.f32.mrf.mxu0
        %v472 = vadd.f32 %v428, %v471
        %v473 = vpop.f32.mrf.mxu0
        %v474 = vpop.f32.mrf.mxu0
        %v475 = vpop.f32.mrf.mxu0
        %476 = vdwg.mxu0
        %v477 = vmax.f32 %v472, 0.0
        %v478 = vadd.f32 %v307, %v477
        %479 = vst [vmem:[%s279] sm:$0xff] %v478
        %s480 = sand.u32 %s169, 1
        %s481 = scalar_lea.sflag [#allocation3], %s480
        %s482 = sand.u32 %s169, 1
        %s483 = smul.addr %s482, 8
        %s484 = scalar_lea.vmem [#allocation2], %s483
        // Predicated region
        $region45: #{gcn_stack_forward.1} parent=39 // pred_check
          %p485 = pneg %p179
        $region46: #{gcn_stack_forward.1} parent=39 // pred_check_branch
          %487 = sbr.rel (%p485) target = $region48
        $region47: #{gcn_stack_forward.1} parent=39 // pred_region
          %s489 = ssub.s32 128, 128
          %490 = vsyncadd %s481, %s489
          %s491 = smul.addr %s23, 128
          %s492 = scalar_lea.hbm %s5, %s491
          %s494 = sshll.u32 %s484, 4
          %s495 = int_to_ptr.vmem [resolvable:$true] %s494
          %497 = dma.vmem_to_hbm [thread:$0]  %s495, 128, %s492, %s481
        $region48: #{gcn_stack_forward.1} parent=39 // pred_fallthru
          _
      $region40: #{gcn_stack_forward.1} parent=5 // pred_fallthru
        _
      %p498 = scmp.le.s32.totalorder 2, %s14
      // Predicated region
      $region49: #{gcn_stack_forward.1} parent=5 // pred_check
        %p499 = pneg %p498
      $region50: #{gcn_stack_forward.1} parent=5 // pred_check_branch
        %501 = sbr.rel (%p499) target = $region52
      $region51: #{gcn_stack_forward.1} parent=5 // pred_region
        %s502 = ssub.s32 %s14, 2
        // Predicated region
        $region53: #{gcn_stack_forward.1} parent=51 // pred_check
          %p503 = pneg %p185
        $region54: #{gcn_stack_forward.1} parent=51 // pred_check_branch
          %505 = sbr.rel (%p503) target = $region56
        $region55: #{gcn_stack_forward.1} parent=51 // pred_region
          %s506 = sand.u32 %s170, 1
          %s507 = scalar_lea.sflag [#allocation3], %s506
          %s508 = sand.u32 %s170, 1
          %s509 = smul.addr %s508, 8
          %s510 = scalar_lea.vmem [#allocation2], %s509
          %511 = dma.done %s507, 128
        $region56: #{gcn_stack_forward.1} parent=51 // pred_fallthru
          _
      $region52: #{gcn_stack_forward.1} parent=5 // pred_fallthru
        _
    $region6: #{gcn_stack_forward.1} parent=1 // loop_footer
      %s18 = sadd.s32 1, %s14
    $region7: #{gcn_stack_forward.1} parent=1 // loop_footer_branch
      %13 = sbr.rel target = $region3
    $region8: #{gcn_stack_forward.1} parent=1 // loop_exit
      _
    %512 = vsyncpa [#allocation3], 1
    %s513 = scalar_lea.sflag [#allocation3], 1
    %514 = vsyncpa %s513, 1

</llo_original>
